<compile_context>
chip_gen: v7x
topology: tpu7x:2x2x1
jax: 0.10.0
libtpu: 0.0.40
codegen_flags: <defaults>
</compile_context>

<pallas_src>
import jax
import jax.numpy as jnp
from jax.experimental import pallas as pl
from jax.experimental.pallas import tpu as pltpu


# ----------------------------------------------------------------------------- helpers
def _round_up(v, m):
    return ((v + m - 1) // m) * m


def _sublane(dtype):
    # Native sublane multiple: 8 for 4-byte, 16 for 2-byte, 32 for 1-byte dtypes.
    return max(8, 32 // jnp.dtype(dtype).itemsize)


def _detect_tensorcores():
    """Best-effort TensorCores per chip (v7x: 2; v5e/v6e: 1)."""
    try:
        kind = jax.devices()[0].device_kind.lower()
        if "v7" in kind or "tpu7" in kind:
            return 2
    except Exception:
        pass
    return 1


def _const_block(shape, pipeline_mode):
    """Full-array block, constant index map -> DMA'd once, resident in VMEM."""
    if pipeline_mode is None:
        return pl.BlockSpec(shape, lambda i: (0, 0))
    return pl.BlockSpec(shape, lambda i: (0, 0), pipeline_mode=pipeline_mode)


def _fused_vmem_bytes(tm, k_in, hidden_dims, k_last, x_itemsize):
    """Conservative per-grid-step VMEM estimate for the fused kernel."""
    params = sum(fi * fo * 2 + fo * 4 for fi, fo in hidden_dims) + k_last * 4 + 4
    widest = max([k_in, k_last] + [fo for _, fo in hidden_dims])
    streamed = 2 * tm * k_in * x_itemsize + 2 * tm * 4   # double-buffered x + out tiles
    live_act = 3 * tm * widest * 4                       # f32 activations / temporaries
    return 2 * params + streamed + live_act              # params counted double-buffered


# ----------------------------------------------------------------------------- kernels
def _make_fused_kernel(num_hidden, negative_slope):
    """Fused MLP: hidden Linear+LeakyReLU stack (bf16 MXU, f32 acc) + sigmoid head."""

    def kernel(*refs):
        # refs: x(tm,K_in) | [W_l(K_l,N_l) bf16, b_l(1,N_l) f32] * num_hidden |
        #       w_out(1,K_last) f32 | b_out(1,1) f32 | out(tm,1)
        x_ref = refs[0]
        o_ref = refs[-1]

        h = x_ref[...].astype(jnp.float32)
        for l in range(num_hidden):
            w = refs[1 + 2 * l][...]                       # bf16 -> full-rate MXU
            b = refs[2 + 2 * l][...]                       # f32
            z = jnp.dot(h.astype(jnp.bfloat16), w,
                        preferred_element_type=jnp.float32) + b
            h = jnp.where(z >= 0, z, negative_slope * z)   # LeakyReLU epilogue in f32

        w_row = refs[-3][...]                              # (1, K_last)
        b_out = refs[-2][...]                              # (1, 1)
        # Degenerate N=1 projection on VPU + XLU (lane reduction), not the MXU.
        logits = jnp.sum(h * w_row, axis=-1, keepdims=True) + b_out
        o_ref[...] = jax.nn.sigmoid(logits).astype(o_ref.dtype)

    return kernel


def _make_streamed_layer_kernel(negative_slope):
    """One Linear+LeakyReLU layer with the weight streamed over a K-reduction axis."""

    def kernel(x_ref, w_ref, b_ref, o_ref, acc_ref):
        k = pl.program_id(2)

        @pl.when(k == 0)
        def _():
            acc_ref[...] = jnp.zeros_like(acc_ref)

        acc_ref[...] += jnp.dot(x_ref[...].astype(jnp.bfloat16), w_ref[...],
                                preferred_element_type=jnp.float32)

        @pl.when(k == pl.num_programs(2) - 1)
        def _():
            z = acc_ref[...] + b_ref[...]
            o_ref[...] = jnp.where(z >= 0, z, negative_slope * z).astype(o_ref.dtype)

    return kernel


# ----------------------------------------------------------------------------- wrappers
def _streamed_linear_leaky(x, w_bf16, b_row, *, negative_slope,
                           tm=256, tn=256, tk=512, out_dtype=jnp.bfloat16):
    """Layer whose weight is too big to keep resident: tiled matmul + LeakyReLU."""
    M, K = x.shape
    _, N = w_bf16.shape

    sub_m = max(_sublane(x.dtype), _sublane(out_dtype))
    tm = min(_round_up(tm, sub_m), _round_up(M, sub_m))
    tk = min(tk, _round_up(K, 128))
    tn = min(tn, _round_up(N, 128))

    # Zero-pad K (so partial K blocks never feed garbage into the accumulator) and
    # N (so padded output columns are exactly LeakyReLU(0)=0, sliced off below).
    Kp, Np = _round_up(K, tk), _round_up(N, tn)
    if Kp != K:
        x = jnp.pad(x, ((0, 0), (0, Kp - K)))
        w_bf16 = jnp.pad(w_bf16, ((0, Kp - K), (0, 0)))
    if Np != N:
        w_bf16 = jnp.pad(w_bf16, ((0, 0), (0, Np - N)))
        b_row = jnp.pad(b_row, ((0, 0), (0, Np - N)))

    grid = (pl.cdiv(M, tm), Np // tn, Kp // tk)
    out = pl.pallas_call(
        _make_streamed_layer_kernel(negative_slope),
        out_shape=jax.ShapeDtypeStruct((M, Np), out_dtype),
        grid_spec=pltpu.PrefetchScalarGridSpec(
            num_scalar_prefetch=0,
            grid=grid,
            in_specs=[pl.BlockSpec((tm, tk), lambda i, j, k: (i, k)),
                      pl.BlockSpec((tk, tn), lambda i, j, k: (k, j)),
                      pl.BlockSpec((1, tn), lambda i, j, k: (0, j))],
            out_specs=pl.BlockSpec((tm, tn), lambda i, j, k: (i, j)),
            scratch_shapes=[pltpu.VMEM((tm, tn), jnp.float32)]),
        compiler_params=pltpu.CompilerParams(
            dimension_semantics=("parallel", "parallel", "arbitrary")),
    )(x, w_bf16, b_row)
    return out[:, :N] if Np != N else out


def discriminator_forward(x, hidden_params, out_params, *,
                          negative_slope=0.2,
                          max_tile_m=512,
                          num_tensorcores=None,
                          resident_weight_limit_bytes=16 << 20,
                          vmem_budget_bytes=40 << 20,
                          out_dtype=None):
    """Fused Pallas forward pass of the Discriminator.

    x             : (batch, in_features) float array
    hidden_params : list of (W (in_f, out_f), b (out_f,)) for the FullyConnected stack
    out_params    : (W (fc_sizes[-1], 1), b (1,)) for D_out
    returns       : (batch, 1) probabilities
    """
    M, K_in = x.shape
    out_dtype = x.dtype if out_dtype is None else out_dtype

    # bf16 weights: full-rate MXU on every generation, half the resident VMEM.
    hidden_w = [w.astype(jnp.bfloat16) for (w, _) in hidden_params]
    hidden_b = [b.reshape(1, -1).astype(jnp.float32) for (_, b) in hidden_params]

    # Guard the "all weights resident" design: peel oversized leading layers off
    # into a streamed tiled-matmul pallas_call, keep the remainder fused.
    total_w_bytes = sum(int(w.size) * 2 for w in hidden_w)
    if hidden_params and total_w_bytes > resident_weight_limit_bytes:
        h1 = _streamed_linear_leaky(x, hidden_w[0], hidden_b[0],
                                    negative_slope=negative_slope)
        return discriminator_forward(
            h1, hidden_params[1:], out_params,
            negative_slope=negative_slope, max_tile_m=max_tile_m,
            num_tensorcores=num_tensorcores,
            resident_weight_limit_bytes=resident_weight_limit_bytes,
            vmem_budget_bytes=vmem_budget_bytes, out_dtype=out_dtype)

    w_out, b_out = out_params
    k_last = int(w_out.shape[0])
    w_out_row = w_out.reshape(1, k_last).astype(jnp.float32)
    b_out_2d = b_out.reshape(1, 1).astype(jnp.float32)
    hidden_dims = [(int(w.shape[0]), int(w.shape[1])) for w in hidden_w]

    # ---- batch-tile selection -------------------------------------------------
    sub = _sublane(x.dtype)
    cores = _detect_tensorcores() if num_tensorcores is None else int(num_tensorcores)
    m_pad = _round_up(M, sub)
    max_tile_m = _round_up(max(int(max_tile_m), sub), sub)
    if cores > 1 and M >= 128 * cores:
        # Give the "parallel" batch axis >= `cores` grid points (v7x: 2 TCs).
        tm = _round_up(pl.cdiv(M, cores), sub)
    else:
        tm = m_pad
    tm = min(tm, max_tile_m, m_pad)
    # Shrink the tile until the per-step VMEM estimate fits the budget.
    while tm > sub and _fused_vmem_bytes(tm, K_in, hidden_dims, k_last,
                                         x.dtype.itemsize) > vmem_budget_bytes:
        tm = max(sub, _round_up(tm // 2, sub))
    if tm >= M:
        tm = M            # single full-batch block (grid == (1,))
    grid = (pl.cdiv(M, tm),)
    # NOTE: partial last tile reads garbage pad rows; rows are independent and
    # out-of-range output rows are masked on writeback, so results stay correct.

    est = _fused_vmem_bytes(tm, K_in, hidden_dims, k_last, x.dtype.itemsize)
    vmem_limit = int(min(max(32 << 20, est + (8 << 20)), 100 << 20))

    flops = 2 * M * (sum(f * o for f, o in hidden_dims) + k_last)
    bytes_accessed = (int(x.size) * x.dtype.itemsize
                      + sum(int(w.size) * 2 + int(b.size) * 4
                            for w, b in zip(hidden_w, hidden_b))
                      + k_last * 4 + 4
                      + M * jnp.dtype(out_dtype).itemsize)
    cost = pl.CostEstimate(flops=int(flops), transcendentals=int(M),
                           bytes_accessed=int(bytes_accessed))

    kernel = _make_fused_kernel(len(hidden_dims), negative_slope)

    def run(weight_mode):
        in_specs = [pl.BlockSpec((tm, K_in), lambda i: (i, 0))]
        args = [x]
        for w, b in zip(hidden_w, hidden_b):
            fin, fout = (int(w.shape[0]), int(w.shape[1]))
            in_specs.append(_const_block((fin, fout), weight_mode))
            in_specs.append(_const_block((1, fout), weight_mode))
            args.extend([w, b])
        in_specs.append(_const_block((1, k_last), weight_mode))
        in_specs.append(_const_block((1, 1), weight_mode))
        args.extend([w_out_row, b_out_2d])

        return pl.pallas_call(
            kernel,
            out_shape=jax.ShapeDtypeStruct((M, 1), out_dtype),
            grid_spec=pltpu.PrefetchScalarGridSpec(
                num_scalar_prefetch=0,
                grid=grid,
                in_specs=in_specs,
                out_specs=pl.BlockSpec((tm, 1), lambda i: (i, 0)),
            ),
            compiler_params=pltpu.CompilerParams(
                dimension_semantics=("parallel",),
                vmem_limit_bytes=vmem_limit,
            ),
            cost_estimate=cost,
        )(*args)

    try:
        # Constant-index param blocks only need ONE VMEM buffer: single-buffer them
        # so the resident weight footprint is not doubled by the default pipeliner.
        return run(pl.Buffered(1))
    except Exception:
        # TODO(synk): fall back to default double buffering on jax versions that
        # reject single-buffered (pl.Buffered(1)) constant-index blocks.
        return run(None)


# ----------------------------------------------------------------------------- reference
def discriminator_reference(x, hidden_params, out_params, negative_slope=0.2):
    """Pure-JAX f32 reference for correctness checking."""
    h = x.astype(jnp.float32)
    for w, b in hidden_params:
        z = h @ w + b
        h = jnp.where(z >= 0, z, negative_slope * z)
    w_out, b_out = out_params
    z = h @ w_out + b_out
    return jax.nn.sigmoid(z).astype(x.dtype)


def init_discriminator_params(key, in_features, fc_sizes):
    """Mirror of Discriminator.weights_init: W ~ N(0, 0.02), b = 0."""
    sizes = [in_features, *fc_sizes]
    hidden_params = []
    for fin, fout in zip(sizes[:-1], sizes[1:]):
        key, wkey = jax.random.split(key)
        w = 0.02 * jax.random.normal(wkey, (fin, fout), dtype=jnp.float32)
        b = jnp.zeros((fout,), dtype=jnp.float32)
        hidden_params.append((w, b))
    key, wkey = jax.random.split(key)
    w_out = 0.02 * jax.random.normal(wkey, (sizes[-1], 1), dtype=jnp.float32)
    b_out = jnp.zeros((1,), dtype=jnp.float32)
    return key, hidden_params, (w_out, b_out)


if __name__ == "__main__":
    key = jax.random.PRNGKey(0)

    # --- Test 1: small fully-fused path (all weights resident in VMEM) ---------
    batch, in_features, fc_sizes = 8, 64, [32, 16]
    key, hidden_params, out_params = init_discriminator_params(
        key, in_features, fc_sizes)
    key, xkey = jax.random.split(key)
    x = jax.random.normal(xkey, (batch, in_features), dtype=jnp.float32)

    y = jax.block_until_ready(discriminator_forward(x, hidden_params, out_params))
    y_ref = discriminator_reference(x, hidden_params, out_params)

    assert y.shape == (batch, 1) and y.dtype == x.dtype
    assert bool(jnp.all(jnp.isfinite(y)))
    # bf16 MXU matmuls -> tolerance relaxed vs. the f32 reference.
    assert bool(jnp.allclose(y, y_ref, atol=2e-2, rtol=2e-2))

    # --- Test 2: exercise the streamed-layer fallback, multi-tile batch grid
    #     (partial last tile) and the explicit multi-TensorCore split knob. -----
    batch2, in_f2, fc2 = 20, 128, [64, 32]
    key, hidden2, out2 = init_discriminator_params(key, in_f2, fc2)
    key, xkey2 = jax.random.split(key)
    x2 = jax.random.normal(xkey2, (batch2, in_f2), dtype=jnp.float32)

    y2 = jax.block_until_ready(
        discriminator_forward(x2, hidden2, out2,
                              max_tile_m=16, num_tensorcores=2,
                              resident_weight_limit_bytes=0))
    y2_ref = discriminator_reference(x2, hidden2, out2)

    assert y2.shape == (batch2, 1) and y2.dtype == x2.dtype
    assert bool(jnp.all(jnp.isfinite(y2)))
    assert bool(jnp.allclose(y2, y2_ref, atol=3e-2, rtol=3e-2))

    print("KERNEL_OK")
</pallas_src>

<mosaic_0001>
module attributes {stable_mosaic.version = 11 : i64} {
  func.func @kernel(%arg0: i32, %arg1: memref<8x64xf32, #tpu.memory_space<vmem>>, %arg2: memref<64x32xbf16, #tpu.memory_space<vmem>>, %arg3: memref<1x32xf32, #tpu.memory_space<vmem>>, %arg4: memref<32x16xbf16, #tpu.memory_space<vmem>>, %arg5: memref<1x16xf32, #tpu.memory_space<vmem>>, %arg6: memref<1x16xf32, #tpu.memory_space<vmem>>, %arg7: memref<1x1xf32, #tpu.memory_space<vmem>>, %arg8: memref<8x1xf32, #tpu.memory_space<vmem>>) attributes {dimension_semantics = [#tpu.dimension_semantics<parallel>], iteration_bounds = array<i64: 1>, scalar_prefetch = 0 : i64, scratch_operands = 0 : i64, tpu.core_type = #tpu.core_type<tc>, window_params = [{transform_indices = @transform_0, window_bounds = array<i64: 8, 64>}, {pipeline_mode = #tpu.pipeline_mode<synchronous>, transform_indices = @transform_1, window_bounds = array<i64: 64, 32>}, {pipeline_mode = #tpu.pipeline_mode<synchronous>, transform_indices = @transform_2, window_bounds = array<i64: 1, 32>}, {pipeline_mode = #tpu.pipeline_mode<synchronous>, transform_indices = @transform_3, window_bounds = array<i64: 32, 16>}, {pipeline_mode = #tpu.pipeline_mode<synchronous>, transform_indices = @transform_4, window_bounds = array<i64: 1, 16>}, {pipeline_mode = #tpu.pipeline_mode<synchronous>, transform_indices = @transform_5, window_bounds = array<i64: 1, 16>}, {pipeline_mode = #tpu.pipeline_mode<synchronous>, transform_indices = @transform_6, window_bounds = array<i64: 1, 1>}, {transform_indices = @transform_7, window_bounds = array<i64: 8, 1>}]} {
    %c0 = arith.constant 0 : index
    %c0_0 = arith.constant 0 : index
    %0 = vector.load %arg1[%c0, %c0_0] : memref<8x64xf32, #tpu.memory_space<vmem>>, vector<8x64xf32>
    %c0_1 = arith.constant 0 : index
    %c0_2 = arith.constant 0 : index
    %1 = vector.load %arg2[%c0_1, %c0_2] : memref<64x32xbf16, #tpu.memory_space<vmem>>, vector<64x32xbf16>
    %c0_3 = arith.constant 0 : index
    %c0_4 = arith.constant 0 : index
    %2 = vector.load %arg3[%c0_3, %c0_4] : memref<1x32xf32, #tpu.memory_space<vmem>>, vector<1x32xf32>
    %3 = arith.truncf %0 : vector<8x64xf32> to vector<8x64xbf16>
    %cst = arith.constant dense<0.000000e+00> : vector<8x32xf32>
    %4 = tpu.matmul %3, %1, %cst {dimension_numbers = #tpu.dot_dimension_numbers<[1], [0], [0], [1], [0, 0, 1, 1], [], []>} : vector<8x64xbf16>, vector<64x32xbf16>, vector<8x32xf32> -> vector<8x32xf32>
    %5 = vector.broadcast %2 : vector<1x32xf32> to vector<8x32xf32>
    %6 = arith.addf %4, %5 : vector<8x32xf32>
    %cst_5 = arith.constant 0.000000e+00 : f32
    %7 = vector.broadcast %cst_5 : f32 to vector<8x32xf32>
    %8 = arith.cmpf oge, %6, %7 : vector<8x32xf32>
    %cst_6 = arith.constant 2.000000e-01 : f32
    %9 = vector.broadcast %cst_6 : f32 to vector<8x32xf32>
    %10 = arith.mulf %9, %6 : vector<8x32xf32>
    %11 = arith.select %8, %6, %10 : vector<8x32xi1>, vector<8x32xf32>
    %c0_7 = arith.constant 0 : index
    %c0_8 = arith.constant 0 : index
    %12 = vector.load %arg4[%c0_7, %c0_8] : memref<32x16xbf16, #tpu.memory_space<vmem>>, vector<32x16xbf16>
    %c0_9 = arith.constant 0 : index
    %c0_10 = arith.constant 0 : index
    %13 = vector.load %arg5[%c0_9, %c0_10] : memref<1x16xf32, #tpu.memory_space<vmem>>, vector<1x16xf32>
    %14 = arith.truncf %11 : vector<8x32xf32> to vector<8x32xbf16>
    %cst_11 = arith.constant dense<0.000000e+00> : vector<8x16xf32>
    %15 = tpu.matmul %14, %12, %cst_11 {dimension_numbers = #tpu.dot_dimension_numbers<[1], [0], [0], [1], [0, 0, 1, 1], [], []>} : vector<8x32xbf16>, vector<32x16xbf16>, vector<8x16xf32> -> vector<8x16xf32>
    %16 = vector.broadcast %13 : vector<1x16xf32> to vector<8x16xf32>
    %17 = arith.addf %15, %16 : vector<8x16xf32>
    %cst_12 = arith.constant 0.000000e+00 : f32
    %18 = vector.broadcast %cst_12 : f32 to vector<8x16xf32>
    %19 = arith.cmpf oge, %17, %18 : vector<8x16xf32>
    %cst_13 = arith.constant 2.000000e-01 : f32
    %20 = vector.broadcast %cst_13 : f32 to vector<8x16xf32>
    %21 = arith.mulf %20, %17 : vector<8x16xf32>
    %22 = arith.select %19, %17, %21 : vector<8x16xi1>, vector<8x16xf32>
    %c0_14 = arith.constant 0 : index
    %c0_15 = arith.constant 0 : index
    %23 = vector.load %arg6[%c0_14, %c0_15] : memref<1x16xf32, #tpu.memory_space<vmem>>, vector<1x16xf32>
    %c0_16 = arith.constant 0 : index
    %c0_17 = arith.constant 0 : index
    %24 = vector.load %arg7[%c0_16, %c0_17] : memref<1x1xf32, #tpu.memory_space<vmem>>, vector<1x1xf32>
    %25 = vector.broadcast %23 : vector<1x16xf32> to vector<8x16xf32>
    %26 = arith.mulf %22, %25 : vector<8x16xf32>
    %cst_18 = arith.constant dense<0.000000e+00> : vector<8xf32>
    %27 = vector.multi_reduction <add>, %26, %cst_18 [1] : vector<8x16xf32> to vector<8xf32>
    %28 = vector.shape_cast %27 : vector<8xf32> to vector<8x1xf32>
    %29 = vector.broadcast %24 : vector<1x1xf32> to vector<8x1xf32>
    %30 = arith.addf %28, %29 : vector<8x1xf32>
    %31 = arith.negf %30 : vector<8x1xf32>
    %32 = math.exp %31 : vector<8x1xf32>
    %cst_19 = arith.constant 1.000000e+00 : f32
    %33 = vector.broadcast %cst_19 : f32 to vector<8x1xf32>
    %34 = arith.addf %33, %32 : vector<8x1xf32>
    %35 = arith.divf %33, %34 : vector<8x1xf32>
    %c0_20 = arith.constant 0 : index
    %c0_21 = arith.constant 0 : index
    %36 = vector.load %arg8[%c0_20, %c0_21] : memref<8x1xf32, #tpu.memory_space<vmem>>, vector<8x1xf32>
    tpu.vector_store %arg8[%c0_20, %c0_21], %35 {strides = array<i32>} : memref<8x1xf32, #tpu.memory_space<vmem>>, vector<8x1xf32>,
    return
  }
  func.func @transform_0(%arg0: i32) -> (i32, i32) {
    %c0_i32 = arith.constant 0 : i32
    %c0_i32_0 = arith.constant 0 : i32
    return %arg0, %c0_i32 : i32, i32
  }
  func.func @transform_1(%arg0: i32) -> (i32, i32) {
    %c0_i32 = arith.constant 0 : i32
    %c0_i32_0 = arith.constant 0 : i32
    %c0_i32_1 = arith.constant 0 : i32
    return %c0_i32, %c0_i32_0 : i32, i32
  }
  func.func @transform_2(%arg0: i32) -> (i32, i32) {
    %c0_i32 = arith.constant 0 : i32
    %c0_i32_0 = arith.constant 0 : i32
    %c0_i32_1 = arith.constant 0 : i32
    return %c0_i32, %c0_i32_0 : i32, i32
  }
  func.func @transform_3(%arg0: i32) -> (i32, i32) {
    %c0_i32 = arith.constant 0 : i32
    %c0_i32_0 = arith.constant 0 : i32
    %c0_i32_1 = arith.constant 0 : i32
    return %c0_i32, %c0_i32_0 : i32, i32
  }
  func.func @transform_4(%arg0: i32) -> (i32, i32) {
    %c0_i32 = arith.constant 0 : i32
    %c0_i32_0 = arith.constant 0 : i32
    %c0_i32_1 = arith.constant 0 : i32
    return %c0_i32, %c0_i32_0 : i32, i32
  }
  func.func @transform_5(%arg0: i32) -> (i32, i32) {
    %c0_i32 = arith.constant 0 : i32
    %c0_i32_0 = arith.constant 0 : i32
    %c0_i32_1 = arith.constant 0 : i32
    return %c0_i32, %c0_i32_0 : i32, i32
  }
  func.func @transform_6(%arg0: i32) -> (i32, i32) {
    %c0_i32 = arith.constant 0 : i32
    %c0_i32_0 = arith.constant 0 : i32
    %c0_i32_1 = arith.constant 0 : i32
    return %c0_i32, %c0_i32_0 : i32, i32
  }
  func.func @transform_7(%arg0: i32) -> (i32, i32) {
    %c0_i32 = arith.constant 0 : i32
    %c0_i32_0 = arith.constant 0 : i32
    return %arg0, %c0_i32 : i32, i32
  }
}

module attributes {stable_mosaic.version = 11 : i64} {
  func.func @kernel(%arg0: i32, %arg1: memref<8x64xf32, #tpu.memory_space<vmem>>, %arg2: memref<64x32xbf16, #tpu.memory_space<vmem>>, %arg3: memref<1x32xf32, #tpu.memory_space<vmem>>, %arg4: memref<32x16xbf16, #tpu.memory_space<vmem>>, %arg5: memref<1x16xf32, #tpu.memory_space<vmem>>, %arg6: memref<1x16xf32, #tpu.memory_space<vmem>>, %arg7: memref<1x1xf32, #tpu.memory_space<vmem>>, %arg8: memref<8x1xf32, #tpu.memory_space<vmem>>) attributes {dimension_semantics = [#tpu.dimension_semantics<parallel>], iteration_bounds = array<i64: 1>, scalar_prefetch = 0 : i64, scratch_operands = 0 : i64, tpu.core_type = #tpu.core_type<tc>, window_params = [{transform_indices = @transform_0, window_bounds = array<i64: 8, 64>}, {pipeline_mode = #tpu.pipeline_mode<synchronous>, transform_indices = @transform_1, window_bounds = array<i64: 64, 32>}, {pipeline_mode = #tpu.pipeline_mode<synchronous>, transform_indices = @transform_2, window_bounds = array<i64: 1, 32>}, {pipeline_mode = #tpu.pipeline_mode<synchronous>, transform_indices = @transform_3, window_bounds = array<i64: 32, 16>}, {pipeline_mode = #tpu.pipeline_mode<synchronous>, transform_indices = @transform_4, window_bounds = array<i64: 1, 16>}, {pipeline_mode = #tpu.pipeline_mode<synchronous>, transform_indices = @transform_5, window_bounds = array<i64: 1, 16>}, {pipeline_mode = #tpu.pipeline_mode<synchronous>, transform_indices = @transform_6, window_bounds = array<i64: 1, 1>}, {transform_indices = @transform_7, window_bounds = array<i64: 8, 1>}]} {
    %c0 = arith.constant 0 : index
    %c0_0 = arith.constant 0 : index
    %0 = vector.load %arg1[%c0, %c0_0] : memref<8x64xf32, #tpu.memory_space<vmem>>, vector<8x64xf32>
    %c0_1 = arith.constant 0 : index
    %c0_2 = arith.constant 0 : index
    %1 = vector.load %arg2[%c0_1, %c0_2] : memref<64x32xbf16, #tpu.memory_space<vmem>>, vector<64x32xbf16>
    %c0_3 = arith.constant 0 : index
    %c0_4 = arith.constant 0 : index
    %2 = vector.load %arg3[%c0_3, %c0_4] : memref<1x32xf32, #tpu.memory_space<vmem>>, vector<1x32xf32>
    %3 = arith.truncf %0 : vector<8x64xf32> to vector<8x64xbf16>
    %cst = arith.constant dense<0.000000e+00> : vector<8x32xf32>
    %4 = tpu.matmul %3, %1, %cst {dimension_numbers = #tpu.dot_dimension_numbers<[1], [0], [0], [1], [0, 0, 1, 1], [], []>} : vector<8x64xbf16>, vector<64x32xbf16>, vector<8x32xf32> -> vector<8x32xf32>
    %5 = vector.broadcast %2 : vector<1x32xf32> to vector<8x32xf32>
    %6 = arith.addf %4, %5 : vector<8x32xf32>
    %cst_5 = arith.constant 0.000000e+00 : f32
    %7 = vector.broadcast %cst_5 : f32 to vector<8x32xf32>
    %8 = arith.cmpf oge, %6, %7 : vector<8x32xf32>
    %cst_6 = arith.constant 2.000000e-01 : f32
    %9 = vector.broadcast %cst_6 : f32 to vector<8x32xf32>
    %10 = arith.mulf %9, %6 : vector<8x32xf32>
    %11 = arith.select %8, %6, %10 : vector<8x32xi1>, vector<8x32xf32>
    %c0_7 = arith.constant 0 : index
    %c0_8 = arith.constant 0 : index
    %12 = vector.load %arg4[%c0_7, %c0_8] : memref<32x16xbf16, #tpu.memory_space<vmem>>, vector<32x16xbf16>
    %c0_9 = arith.constant 0 : index
    %c0_10 = arith.constant 0 : index
    %13 = vector.load %arg5[%c0_9, %c0_10] : memref<1x16xf32, #tpu.memory_space<vmem>>, vector<1x16xf32>
    %14 = arith.truncf %11 : vector<8x32xf32> to vector<8x32xbf16>
    %cst_11 = arith.constant dense<0.000000e+00> : vector<8x16xf32>
    %15 = tpu.matmul %14, %12, %cst_11 {dimension_numbers = #tpu.dot_dimension_numbers<[1], [0], [0], [1], [0, 0, 1, 1], [], []>} : vector<8x32xbf16>, vector<32x16xbf16>, vector<8x16xf32> -> vector<8x16xf32>
    %16 = vector.broadcast %13 : vector<1x16xf32> to vector<8x16xf32>
    %17 = arith.addf %15, %16 : vector<8x16xf32>
    %cst_12 = arith.constant 0.000000e+00 : f32
    %18 = vector.broadcast %cst_12 : f32 to vector<8x16xf32>
    %19 = arith.cmpf oge, %17, %18 : vector<8x16xf32>
    %cst_13 = arith.constant 2.000000e-01 : f32
    %20 = vector.broadcast %cst_13 : f32 to vector<8x16xf32>
    %21 = arith.mulf %20, %17 : vector<8x16xf32>
    %22 = arith.select %19, %17, %21 : vector<8x16xi1>, vector<8x16xf32>
    %c0_14 = arith.constant 0 : index
    %c0_15 = arith.constant 0 : index
    %23 = vector.load %arg6[%c0_14, %c0_15] : memref<1x16xf32, #tpu.memory_space<vmem>>, vector<1x16xf32>
    %c0_16 = arith.constant 0 : index
    %c0_17 = arith.constant 0 : index
    %24 = vector.load %arg7[%c0_16, %c0_17] : memref<1x1xf32, #tpu.memory_space<vmem>>, vector<1x1xf32>
    %25 = vector.broadcast %23 : vector<1x16xf32> to vector<8x16xf32>
    %26 = arith.mulf %22, %25 : vector<8x16xf32>
    %cst_18 = arith.constant dense<0.000000e+00> : vector<8xf32>
    %27 = vector.multi_reduction <add>, %26, %cst_18 [1] : vector<8x16xf32> to vector<8xf32>
    %28 = vector.shape_cast %27 : vector<8xf32> to vector<8x1xf32>
    %29 = vector.broadcast %24 : vector<1x1xf32> to vector<8x1xf32>
    %30 = arith.addf %28, %29 : vector<8x1xf32>
    %31 = arith.negf %30 : vector<8x1xf32>
    %32 = math.exp %31 : vector<8x1xf32>
    %cst_19 = arith.constant 1.000000e+00 : f32
    %33 = vector.broadcast %cst_19 : f32 to vector<8x1xf32>
    %34 = arith.addf %33, %32 : vector<8x1xf32>
    %35 = arith.divf %33, %34 : vector<8x1xf32>
    %c0_20 = arith.constant 0 : index
    %c0_21 = arith.constant 0 : index
    %36 = vector.load %arg8[%c0_20, %c0_21] : memref<8x1xf32, #tpu.memory_space<vmem>>, vector<8x1xf32>
    tpu.vector_store %arg8[%c0_20, %c0_21], %35 {strides = array<i32>} : memref<8x1xf32, #tpu.memory_space<vmem>>, vector<8x1xf32>,
    return
  }
  func.func @transform_0(%arg0: i32) -> (i32, i32) {
    %c0_i32 = arith.constant 0 : i32
    %c0_i32_0 = arith.constant 0 : i32
    return %arg0, %c0_i32 : i32, i32
  }
  func.func @transform_1(%arg0: i32) -> (i32, i32) {
    %c0_i32 = arith.constant 0 : i32
    %c0_i32_0 = arith.constant 0 : i32
    %c0_i32_1 = arith.constant 0 : i32
    return %c0_i32, %c0_i32_0 : i32, i32
  }
  func.func @transform_2(%arg0: i32) -> (i32, i32) {
    %c0_i32 = arith.constant 0 : i32
    %c0_i32_0 = arith.constant 0 : i32
    %c0_i32_1 = arith.constant 0 : i32
    return %c0_i32, %c0_i32_0 : i32, i32
  }
  func.func @transform_3(%arg0: i32) -> (i32, i32) {
    %c0_i32 = arith.constant 0 : i32
    %c0_i32_0 = arith.constant 0 : i32
    %c0_i32_1 = arith.constant 0 : i32
    return %c0_i32, %c0_i32_0 : i32, i32
  }
  func.func @transform_4(%arg0: i32) -> (i32, i32) {
    %c0_i32 = arith.constant 0 : i32
    %c0_i32_0 = arith.constant 0 : i32
    %c0_i32_1 = arith.constant 0 : i32
    return %c0_i32, %c0_i32_0 : i32, i32
  }
  func.func @transform_5(%arg0: i32) -> (i32, i32) {
    %c0_i32 = arith.constant 0 : i32
    %c0_i32_0 = arith.constant 0 : i32
    %c0_i32_1 = arith.constant 0 : i32
    return %c0_i32, %c0_i32_0 : i32, i32
  }
  func.func @transform_6(%arg0: i32) -> (i32, i32) {
    %c0_i32 = arith.constant 0 : i32
    %c0_i32_0 = arith.constant 0 : i32
    %c0_i32_1 = arith.constant 0 : i32
    return %c0_i32, %c0_i32_0 : i32, i32
  }
  func.func @transform_7(%arg0: i32) -> (i32, i32) {
    %c0_i32 = arith.constant 0 : i32
    %c0_i32_0 = arith.constant 0 : i32
    return %arg0, %c0_i32 : i32, i32
  }
}

</mosaic_0001>

<llo_original>
// kernel: tpu_custom_call.1
$region0: #{tpu_custom_call.1}
  #allocation0 [shape = 'u32[]', space=smem, size = 0x4, offset = 0x4, fixed_abs, tag = 'smem constant byte address 0x4 - core index']
  #allocation1 [shape = 'u32[144,128]{1,0:T(1,128)}', space=vmem, size = 0x12000, scoped, tag = 'internal scratch']
  #allocation2 [shape = 'f32[1,1]{1,0:T(1,128)S(1)}', space=vmem, size = 0x200, scoped, tag = 'scoped memory for tpu_custom_call.1']
  %s0 = inlined_call_operand.vmem [shape: f32[8,64], index: 0, kind: input, shape index: {}]
  %s1 = inlined_call_operand.vmem [shape: bf16[64,32], index: 1, kind: input, shape index: {}]
  %s2 = inlined_call_operand.vmem [shape: f32[1,32], index: 2, kind: input, shape index: {}]
  %s3 = inlined_call_operand.vmem [shape: bf16[32,16], index: 3, kind: input, shape index: {}]
  %s4 = inlined_call_operand.vmem [shape: f32[1,16], index: 4, kind: input, shape index: {}]
  %s5 = inlined_call_operand.vmem [shape: f32[1,16], index: 5, kind: input, shape index: {}]
  %s6 = inlined_call_operand.<no memory space> [shape: f32[1,1], index: 6, kind: input, shape index: {}]
  %s7 = inlined_call_operand.vmem [shape: f32[8,1], index: 7, kind: output, shape index: {}]
  %s8 = sld [smem:[#allocation0]]
  $region38: #{tpu_custom_call.1} parent=0
    _
  %s10 = ssub.s32 1, %s8
  %s11 = scalar_select 0, %s10, %s8
  %v12 = vstv %s6
  %13 = vst [vmem:[#allocation2] sm:$0x1] %v12
  // Predicated region
  $region2: #{tpu_custom_call.1} parent=0 // pred_check
    _
  $region3: #{tpu_custom_call.1} parent=0 // pred_check_branch
    %15 = sbr.rel (0) target = $region5
  $region4: #{tpu_custom_call.1} parent=0 // pred_region
    _
  $region5: #{tpu_custom_call.1} parent=0 // pred_fallthru
    _
  // Predicated region
  $region6: #{tpu_custom_call.1} parent=0 // pred_check
    _
  $region7: #{tpu_custom_call.1} parent=0 // pred_check_branch
    %17 = sbr.rel (0) target = $region9
  $region8: #{tpu_custom_call.1} parent=0 // pred_region
    _
  $region9: #{tpu_custom_call.1} parent=0 // pred_fallthru
    _
  // Predicated region
  $region10: #{tpu_custom_call.1} parent=0 // pred_check
    _
  $region11: #{tpu_custom_call.1} parent=0 // pred_check_branch
    %19 = sbr.rel (0) target = $region13
  $region12: #{tpu_custom_call.1} parent=0 // pred_region
    _
  $region13: #{tpu_custom_call.1} parent=0 // pred_fallthru
    _
  // Predicated region
  $region14: #{tpu_custom_call.1} parent=0 // pred_check
    _
  $region15: #{tpu_custom_call.1} parent=0 // pred_check_branch
    %21 = sbr.rel (0) target = $region17
  $region16: #{tpu_custom_call.1} parent=0 // pred_region
    _
  $region17: #{tpu_custom_call.1} parent=0 // pred_fallthru
    _
  // Predicated region
  $region18: #{tpu_custom_call.1} parent=0 // pred_check
    _
  $region19: #{tpu_custom_call.1} parent=0 // pred_check_branch
    %23 = sbr.rel (0) target = $region21
  $region20: #{tpu_custom_call.1} parent=0 // pred_region
    _
  $region21: #{tpu_custom_call.1} parent=0 // pred_fallthru
    _
  // Predicated region
  $region22: #{tpu_custom_call.1} parent=0 // pred_check
    _
  $region23: #{tpu_custom_call.1} parent=0 // pred_check_branch
    %25 = sbr.rel (0) target = $region25
  $region24: #{tpu_custom_call.1} parent=0 // pred_region
    _
  $region25: #{tpu_custom_call.1} parent=0 // pred_fallthru
    _
  // Predicated region
  $region26: #{tpu_custom_call.1} parent=0 // pred_check
    _
  $region27: #{tpu_custom_call.1} parent=0 // pred_check_branch
    %27 = sbr.rel (0) target = $region29
  $region28: #{tpu_custom_call.1} parent=0 // pred_region
    _
  $region29: #{tpu_custom_call.1} parent=0 // pred_fallthru
    _
  %v29 = vld [vmem:[%s0] sm:$0xff]
  %v30 = vld [vmem:[%s1] sm:$0xf]
  %v31 = vld [vmem:[%s1 + $0x4] sm:$0xf]
  %v32 = vld [vmem:[%s1 + $0x8] sm:$0xf]
  %v33 = vld [vmem:[%s1 + $0xc] sm:$0xf]
  %v34 = vld [vmem:[%s1 + $0x10] sm:$0xf]
  %v35 = vld [vmem:[%s1 + $0x14] sm:$0xf]
  %v36 = vld [vmem:[%s1 + $0x18] sm:$0xf]
  %v37 = vld [vmem:[%s1 + $0x1c] sm:$0xf]
  %v38 = vld [vmem:[%s2] sm:$0x1]
  %v39 = vpack.c.bf16 %v29, %v29
  %v41 = vlaneseq
  %v42 = vshrl.u32 %v41, 7
  %v43 = vsub.s32 0, %v42
  %v44 = vrot.slane %v38, %v43
  %v54 = vunpack.c.l.b16 %v30
  %v55 = vunpack.c.l.b16 %v31
  %v56 = vunpack.c.l.b16 %v32
  %v57 = vunpack.c.l.b16 %v33
  %v58 = vunpack.c.l.b16 %v34
  %v59 = vunpack.c.l.b16 %v35
  %v60 = vunpack.c.l.b16 %v36
  %v61 = vunpack.c.l.b16 %v37
  %v62 = vpack.c.b16 %v55, %v54
  %v63 = vpack.c.b16 %v57, %v56
  %v64 = vpack.c.b16 %v59, %v58
  %v65 = vpack.c.b16 %v61, %v60
  %vm70 = vcmask 523264
  %v72 = vsel %vm70, %v39, 0
  %74 = vmatprep.subr.bf16.mxu0 0
  %75 = vmatpush1.bf16.msra.mxu0 %v62
  %76 = vmatprep.subr.bf16.mxu0 0
  %77 = vmatpush1.bf16.msra.mxu0 %v63
  %78 = vmatprep.subr.bf16.mxu0 0
  %79 = vmatpush1.bf16.msra.mxu0 %v64
  %80 = vmatprep.subr.bf16.mxu0 0
  %81 = vmatpush1.bf16.msra.mxu0 %v65
  %82 = vmatprep.subr.bf16.mxu0 0
  %83 = vmatpush1.bf16.msra.mxu0 0
  %84 = vmatprep.subr.bf16.mxu0 0
  %85 = vmatpush1.bf16.msra.mxu0 0
  %86 = vmatprep.subr.bf16.mxu0 0
  %87 = vmatpush1.bf16.msra.mxu0 0
  %88 = vmatprep.subr.bf16.mxu0 0
  %89 = vmatpush1.bf16.msra.mxu0 0
  %90 = vmatprep.subr.bf16.mxu0 0
  %91 = vmatpush1.bf16.msra.mxu0 0
  %92 = vmatprep.subr.bf16.mxu0 0
  %93 = vmatpush1.bf16.msra.mxu0 0
  %94 = vmatprep.subr.bf16.mxu0 0
  %95 = vmatpush1.bf16.msra.mxu0 0
  %96 = vmatprep.subr.bf16.mxu0 0
  %97 = vmatpush1.bf16.msra.mxu0 0
  %98 = vmatprep.subr.bf16.mxu0 0
  %99 = vmatpush1.bf16.msra.mxu0 0
  %100 = vmatprep.subr.bf16.mxu0 0
  %101 = vmatpush1.bf16.msra.mxu0 0
  %102 = vmatprep.subr.bf16.mxu0 0
  %103 = vmatpush1.bf16.msra.mxu0 0
  %104 = vmatprep.subr.bf16.mxu0 0
  %105 = vmatpush1.bf16.msra.mxu0 0
  %106 = vmatprep.mubr.bf16.mxu0 0
  %107 = vmatmul.mubr.bf16.gmra.mrb[0].mxu0 %v72
  %v108 = vpop.f32.mrb[0].mxu0
  %v109 = vadd.f32 %v44, %v108
  %v110 = vpop.f32.mrb[0].mxu0
  %v111 = vpop.f32.mrb[0].mxu0
  %v112 = vpop.f32.mrb[0].mxu0
  %113 = vdwg.mxu0
  %vm114 = vcmp.ge.f32.partialorder %v109, 0.0
  %v115 = vmul.f32 %v109, 0.2
  %v116 = vsel %vm114, %v109, %v115
  %v117 = vld [vmem:[%s3] sm:$0xf]
  %v118 = vld [vmem:[%s3 + $0x4] sm:$0xf]
  %v119 = vld [vmem:[%s3 + $0x8] sm:$0xf]
  %v120 = vld [vmem:[%s3 + $0xc] sm:$0xf]
  %v121 = vld [vmem:[%s4] sm:$0x1]
  %v122 = vpack.c.bf16 %v116, %v116
  %v124 = vlaneseq
  %v125 = vshrl.u32 %v124, 7
  %v126 = vsub.s32 0, %v125
  %v127 = vrot.slane %v121, %v126
  %v133 = vunpack.c.l.b16 %v117
  %v134 = vunpack.c.l.b16 %v118
  %v135 = vunpack.c.l.b16 %v119
  %v136 = vunpack.c.l.b16 %v120
  %v137 = vpack.c.b16 %v134, %v133
  %v138 = vpack.c.b16 %v136, %v135
  %vm141 = vcmask 261120
  %v143 = vsel %vm141, %v122, 0
  %145 = vmatprep.subr.bf16.mxu0 0
  %146 = vmatpush1.bf16.msra.mxu0 %v137
  %147 = vmatprep.subr.bf16.mxu0 0
  %148 = vmatpush1.bf16.msra.mxu0 %v138
  %149 = vmatprep.subr.bf16.mxu0 0
  %150 = vmatpush1.bf16.msra.mxu0 0
  %151 = vmatprep.subr.bf16.mxu0 0
  %152 = vmatpush1.bf16.msra.mxu0 0
  %153 = vmatprep.subr.bf16.mxu0 0
  %154 = vmatpush1.bf16.msra.mxu0 0
  %155 = vmatprep.subr.bf16.mxu0 0
  %156 = vmatpush1.bf16.msra.mxu0 0
  %157 = vmatprep.subr.bf16.mxu0 0
  %158 = vmatpush1.bf16.msra.mxu0 0
  %159 = vmatprep.subr.bf16.mxu0 0
  %160 = vmatpush1.bf16.msra.mxu0 0
  %161 = vmatprep.subr.bf16.mxu0 0
  %162 = vmatpush1.bf16.msra.mxu0 0
  %163 = vmatprep.subr.bf16.mxu0 0
  %164 = vmatpush1.bf16.msra.mxu0 0
  %165 = vmatprep.subr.bf16.mxu0 0
  %166 = vmatpush1.bf16.msra.mxu0 0
  %167 = vmatprep.subr.bf16.mxu0 0
  %168 = vmatpush1.bf16.msra.mxu0 0
  %169 = vmatprep.subr.bf16.mxu0 0
  %170 = vmatpush1.bf16.msra.mxu0 0
  %171 = vmatprep.subr.bf16.mxu0 0
  %172 = vmatpush1.bf16.msra.mxu0 0
  %173 = vmatprep.subr.bf16.mxu0 0
  %174 = vmatpush1.bf16.msra.mxu0 0
  %175 = vmatprep.subr.bf16.mxu0 0
  %176 = vmatpush1.bf16.msra.mxu0 0
  %177 = vmatprep.mubr.bf16.mxu0 0
  %178 = vmatmul.mubr.bf16.gmra.mrb[0].mxu0 %v143
  %v179 = vpop.f32.mrb[0].mxu0
  %v180 = vadd.f32 %v127, %v179
  %v181 = vpop.f32.mrb[0].mxu0
  %v182 = vpop.f32.mrb[0].mxu0
  %v183 = vpop.f32.mrb[0].mxu0
  %184 = vdwg.mxu0
  %vm185 = vcmp.ge.f32.partialorder %v180, 0.0
  %v186 = vmul.f32 %v180, 0.2
  %v187 = vsel %vm185, %v180, %v186
  %v188 = vld [vmem:[%s5] sm:$0x1]
  %v189 = vld [vmem:[#allocation2] sm:$0x1]
  %v191 = vlaneseq
  %v192 = vshrl.u32 %v191, 7
  %v193 = vsub.s32 0, %v192
  %v194 = vrot.slane %v188, %v193
  %v196 = vmul.f32 %v187, %v194
  %vm197 = vcmask 130048
  %v198 = vsel %vm197, %v196, 0.0
  %199 = vadd.xlane.f32.xlu0 %v198
  %v200 = vpop.xlane.xlu0 %199
  %v202 = vlaneseq
  %v203 = vshrl.u32 %v202, 7
  %v204 = vsub.s32 0, %v203
  %v205 = vrot.slane %v189, %v204
  %v207 = vadd.f32 %v200, %v205
  %v208 = vxor.u32 %v207, 2147483648
  %v209 = vmul.f32 %v208, 1.442695
  %v210 = vpow.pop %v209
  %v211 = vadd.f32 %v210, 1.0
  %v212 = vrcp.pop %v211
  %v213 = vmul.f32 1.0, %v212
  %vm214 = vcmask 7168
  %215 = vst.msk [vmem:[%s7] sm:$0xff] %vm214, %v213
  // Predicated region
  $region30: #{tpu_custom_call.1} parent=0 // pred_check
    _
  $region31: #{tpu_custom_call.1} parent=0 // pred_check_branch
    %217 = sbr.rel (0) target = $region33
  $region32: #{tpu_custom_call.1} parent=0 // pred_region
    _
  $region33: #{tpu_custom_call.1} parent=0 // pred_fallthru
    _
  // Predicated region
  $region34: #{tpu_custom_call.1} parent=0 // pred_check
    _
  $region35: #{tpu_custom_call.1} parent=0 // pred_check_branch
    %219 = sbr.rel (0) target = $region37
  $region36: #{tpu_custom_call.1} parent=0 // pred_region
    _
  $region37: #{tpu_custom_call.1} parent=0 // pred_fallthru
    _

// kernel: tpu_custom_call.1
$region0: #{tpu_custom_call.1}
  #allocation0 [shape = 'u32[]', space=smem, size = 0x4, offset = 0x4, fixed_abs, tag = 'smem constant byte address 0x4 - core index']
  #allocation1 [shape = 'u32[144,128]{1,0:T(1,128)}', space=vmem, size = 0x12000, scoped, tag = 'internal scratch']
  #allocation2 [shape = 'f32[1,1]{1,0:T(1,128)S(1)}', space=vmem, size = 0x200, scoped, tag = 'scoped memory for tpu_custom_call.1']
  %s0 = inlined_call_operand.vmem [shape: f32[8,64], index: 0, kind: input, shape index: {}]
  %s1 = inlined_call_operand.vmem [shape: bf16[64,32], index: 1, kind: input, shape index: {}]
  %s2 = inlined_call_operand.vmem [shape: f32[1,32], index: 2, kind: input, shape index: {}]
  %s3 = inlined_call_operand.vmem [shape: bf16[32,16], index: 3, kind: input, shape index: {}]
  %s4 = inlined_call_operand.vmem [shape: f32[1,16], index: 4, kind: input, shape index: {}]
  %s5 = inlined_call_operand.vmem [shape: f32[1,16], index: 5, kind: input, shape index: {}]
  %s6 = inlined_call_operand.<no memory space> [shape: f32[1,1], index: 6, kind: input, shape index: {}]
  %s7 = inlined_call_operand.vmem [shape: f32[8,1], index: 7, kind: output, shape index: {}]
  %s8 = sld [smem:[#allocation0]]
  $region38: #{tpu_custom_call.1} parent=0
    _
  %s10 = ssub.s32 1, %s8
  %s11 = scalar_select 0, %s10, %s8
  %v12 = vstv %s6
  %13 = vst [vmem:[#allocation2] sm:$0x1] %v12
  // Predicated region
  $region2: #{tpu_custom_call.1} parent=0 // pred_check
    _
  $region3: #{tpu_custom_call.1} parent=0 // pred_check_branch
    %15 = sbr.rel (0) target = $region5
  $region4: #{tpu_custom_call.1} parent=0 // pred_region
    _
  $region5: #{tpu_custom_call.1} parent=0 // pred_fallthru
    _
  // Predicated region
  $region6: #{tpu_custom_call.1} parent=0 // pred_check
    _
  $region7: #{tpu_custom_call.1} parent=0 // pred_check_branch
    %17 = sbr.rel (0) target = $region9
  $region8: #{tpu_custom_call.1} parent=0 // pred_region
    _
  $region9: #{tpu_custom_call.1} parent=0 // pred_fallthru
    _
  // Predicated region
  $region10: #{tpu_custom_call.1} parent=0 // pred_check
    _
  $region11: #{tpu_custom_call.1} parent=0 // pred_check_branch
    %19 = sbr.rel (0) target = $region13
  $region12: #{tpu_custom_call.1} parent=0 // pred_region
    _
  $region13: #{tpu_custom_call.1} parent=0 // pred_fallthru
    _
  // Predicated region
  $region14: #{tpu_custom_call.1} parent=0 // pred_check
    _
  $region15: #{tpu_custom_call.1} parent=0 // pred_check_branch
    %21 = sbr.rel (0) target = $region17
  $region16: #{tpu_custom_call.1} parent=0 // pred_region
    _
  $region17: #{tpu_custom_call.1} parent=0 // pred_fallthru
    _
  // Predicated region
  $region18: #{tpu_custom_call.1} parent=0 // pred_check
    _
  $region19: #{tpu_custom_call.1} parent=0 // pred_check_branch
    %23 = sbr.rel (0) target = $region21
  $region20: #{tpu_custom_call.1} parent=0 // pred_region
    _
  $region21: #{tpu_custom_call.1} parent=0 // pred_fallthru
    _
  // Predicated region
  $region22: #{tpu_custom_call.1} parent=0 // pred_check
    _
  $region23: #{tpu_custom_call.1} parent=0 // pred_check_branch
    %25 = sbr.rel (0) target = $region25
  $region24: #{tpu_custom_call.1} parent=0 // pred_region
    _
  $region25: #{tpu_custom_call.1} parent=0 // pred_fallthru
    _
  // Predicated region
  $region26: #{tpu_custom_call.1} parent=0 // pred_check
    _
  $region27: #{tpu_custom_call.1} parent=0 // pred_check_branch
    %27 = sbr.rel (0) target = $region29
  $region28: #{tpu_custom_call.1} parent=0 // pred_region
    _
  $region29: #{tpu_custom_call.1} parent=0 // pred_fallthru
    _
  %v29 = vld [vmem:[%s0] sm:$0xff]
  %v30 = vld [vmem:[%s1] sm:$0xf]
  %v31 = vld [vmem:[%s1 + $0x4] sm:$0xf]
  %v32 = vld [vmem:[%s1 + $0x8] sm:$0xf]
  %v33 = vld [vmem:[%s1 + $0xc] sm:$0xf]
  %v34 = vld [vmem:[%s1 + $0x10] sm:$0xf]
  %v35 = vld [vmem:[%s1 + $0x14] sm:$0xf]
  %v36 = vld [vmem:[%s1 + $0x18] sm:$0xf]
  %v37 = vld [vmem:[%s1 + $0x1c] sm:$0xf]
  %v38 = vld [vmem:[%s2] sm:$0x1]
  %v39 = vpack.c.bf16 %v29, %v29
  %v41 = vlaneseq
  %v42 = vshrl.u32 %v41, 7
  %v43 = vsub.s32 0, %v42
  %v44 = vrot.slane %v38, %v43
  %v54 = vunpack.c.l.b16 %v30
  %v55 = vunpack.c.l.b16 %v31
  %v56 = vunpack.c.l.b16 %v32
  %v57 = vunpack.c.l.b16 %v33
  %v58 = vunpack.c.l.b16 %v34
  %v59 = vunpack.c.l.b16 %v35
  %v60 = vunpack.c.l.b16 %v36
  %v61 = vunpack.c.l.b16 %v37
  %v62 = vpack.c.b16 %v55, %v54
  %v63 = vpack.c.b16 %v57, %v56
  %v64 = vpack.c.b16 %v59, %v58
  %v65 = vpack.c.b16 %v61, %v60
  %vm70 = vcmask 523264
  %v72 = vsel %vm70, %v39, 0
  %74 = vmatprep.subr.bf16.mxu0 0
  %75 = vmatpush1.bf16.msra.mxu0 %v62
  %76 = vmatprep.subr.bf16.mxu0 0
  %77 = vmatpush1.bf16.msra.mxu0 %v63
  %78 = vmatprep.subr.bf16.mxu0 0
  %79 = vmatpush1.bf16.msra.mxu0 %v64
  %80 = vmatprep.subr.bf16.mxu0 0
  %81 = vmatpush1.bf16.msra.mxu0 %v65
  %82 = vmatprep.subr.bf16.mxu0 0
  %83 = vmatpush1.bf16.msra.mxu0 0
  %84 = vmatprep.subr.bf16.mxu0 0
  %85 = vmatpush1.bf16.msra.mxu0 0
  %86 = vmatprep.subr.bf16.mxu0 0
  %87 = vmatpush1.bf16.msra.mxu0 0
  %88 = vmatprep.subr.bf16.mxu0 0
  %89 = vmatpush1.bf16.msra.mxu0 0
  %90 = vmatprep.subr.bf16.mxu0 0
  %91 = vmatpush1.bf16.msra.mxu0 0
  %92 = vmatprep.subr.bf16.mxu0 0
  %93 = vmatpush1.bf16.msra.mxu0 0
  %94 = vmatprep.subr.bf16.mxu0 0
  %95 = vmatpush1.bf16.msra.mxu0 0
  %96 = vmatprep.subr.bf16.mxu0 0
  %97 = vmatpush1.bf16.msra.mxu0 0
  %98 = vmatprep.subr.bf16.mxu0 0
  %99 = vmatpush1.bf16.msra.mxu0 0
  %100 = vmatprep.subr.bf16.mxu0 0
  %101 = vmatpush1.bf16.msra.mxu0 0
  %102 = vmatprep.subr.bf16.mxu0 0
  %103 = vmatpush1.bf16.msra.mxu0 0
  %104 = vmatprep.subr.bf16.mxu0 0
  %105 = vmatpush1.bf16.msra.mxu0 0
  %106 = vmatprep.mubr.bf16.mxu0 0
  %107 = vmatmul.mubr.bf16.gmra.mrb[0].mxu0 %v72
  %v108 = vpop.f32.mrb[0].mxu0
  %v109 = vadd.f32 %v44, %v108
  %v110 = vpop.f32.mrb[0].mxu0
  %v111 = vpop.f32.mrb[0].mxu0
  %v112 = vpop.f32.mrb[0].mxu0
  %113 = vdwg.mxu0
  %vm114 = vcmp.ge.f32.partialorder %v109, 0.0
  %v115 = vmul.f32 %v109, 0.2
  %v116 = vsel %vm114, %v109, %v115
  %v117 = vld [vmem:[%s3] sm:$0xf]
  %v118 = vld [vmem:[%s3 + $0x4] sm:$0xf]
  %v119 = vld [vmem:[%s3 + $0x8] sm:$0xf]
  %v120 = vld [vmem:[%s3 + $0xc] sm:$0xf]
  %v121 = vld [vmem:[%s4] sm:$0x1]
  %v122 = vpack.c.bf16 %v116, %v116
  %v124 = vlaneseq
  %v125 = vshrl.u32 %v124, 7
  %v126 = vsub.s32 0, %v125
  %v127 = vrot.slane %v121, %v126
  %v133 = vunpack.c.l.b16 %v117
  %v134 = vunpack.c.l.b16 %v118
  %v135 = vunpack.c.l.b16 %v119
  %v136 = vunpack.c.l.b16 %v120
  %v137 = vpack.c.b16 %v134, %v133
  %v138 = vpack.c.b16 %v136, %v135
  %vm141 = vcmask 261120
  %v143 = vsel %vm141, %v122, 0
  %145 = vmatprep.subr.bf16.mxu0 0
  %146 = vmatpush1.bf16.msra.mxu0 %v137
  %147 = vmatprep.subr.bf16.mxu0 0
  %148 = vmatpush1.bf16.msra.mxu0 %v138
  %149 = vmatprep.subr.bf16.mxu0 0
  %150 = vmatpush1.bf16.msra.mxu0 0
  %151 = vmatprep.subr.bf16.mxu0 0
  %152 = vmatpush1.bf16.msra.mxu0 0
  %153 = vmatprep.subr.bf16.mxu0 0
  %154 = vmatpush1.bf16.msra.mxu0 0
  %155 = vmatprep.subr.bf16.mxu0 0
  %156 = vmatpush1.bf16.msra.mxu0 0
  %157 = vmatprep.subr.bf16.mxu0 0
  %158 = vmatpush1.bf16.msra.mxu0 0
  %159 = vmatprep.subr.bf16.mxu0 0
  %160 = vmatpush1.bf16.msra.mxu0 0
  %161 = vmatprep.subr.bf16.mxu0 0
  %162 = vmatpush1.bf16.msra.mxu0 0
  %163 = vmatprep.subr.bf16.mxu0 0
  %164 = vmatpush1.bf16.msra.mxu0 0
  %165 = vmatprep.subr.bf16.mxu0 0
  %166 = vmatpush1.bf16.msra.mxu0 0
  %167 = vmatprep.subr.bf16.mxu0 0
  %168 = vmatpush1.bf16.msra.mxu0 0
  %169 = vmatprep.subr.bf16.mxu0 0
  %170 = vmatpush1.bf16.msra.mxu0 0
  %171 = vmatprep.subr.bf16.mxu0 0
  %172 = vmatpush1.bf16.msra.mxu0 0
  %173 = vmatprep.subr.bf16.mxu0 0
  %174 = vmatpush1.bf16.msra.mxu0 0
  %175 = vmatprep.subr.bf16.mxu0 0
  %176 = vmatpush1.bf16.msra.mxu0 0
  %177 = vmatprep.mubr.bf16.mxu0 0
  %178 = vmatmul.mubr.bf16.gmra.mrb[0].mxu0 %v143
  %v179 = vpop.f32.mrb[0].mxu0
  %v180 = vadd.f32 %v127, %v179
  %v181 = vpop.f32.mrb[0].mxu0
  %v182 = vpop.f32.mrb[0].mxu0
  %v183 = vpop.f32.mrb[0].mxu0
  %184 = vdwg.mxu0
  %vm185 = vcmp.ge.f32.partialorder %v180, 0.0
  %v186 = vmul.f32 %v180, 0.2
  %v187 = vsel %vm185, %v180, %v186
  %v188 = vld [vmem:[%s5] sm:$0x1]
  %v189 = vld [vmem:[#allocation2] sm:$0x1]
  %v191 = vlaneseq
  %v192 = vshrl.u32 %v191, 7
  %v193 = vsub.s32 0, %v192
  %v194 = vrot.slane %v188, %v193
  %v196 = vmul.f32 %v187, %v194
  %vm197 = vcmask 130048
  %v198 = vsel %vm197, %v196, 0.0
  %199 = vadd.xlane.f32.xlu0 %v198
  %v200 = vpop.xlane.xlu0 %199
  %v202 = vlaneseq
  %v203 = vshrl.u32 %v202, 7
  %v204 = vsub.s32 0, %v203
  %v205 = vrot.slane %v189, %v204
  %v207 = vadd.f32 %v200, %v205
  %v208 = vxor.u32 %v207, 2147483648
  %v209 = vmul.f32 %v208, 1.442695
  %v210 = vpow.pop %v209
  %v211 = vadd.f32 %v210, 1.0
  %v212 = vrcp.pop %v211
  %v213 = vmul.f32 1.0, %v212
  %vm214 = vcmask 7168
  %215 = vst.msk [vmem:[%s7] sm:$0xff] %vm214, %v213
  // Predicated region
  $region30: #{tpu_custom_call.1} parent=0 // pred_check
    _
  $region31: #{tpu_custom_call.1} parent=0 // pred_check_branch
    %217 = sbr.rel (0) target = $region33
  $region32: #{tpu_custom_call.1} parent=0 // pred_region
    _
  $region33: #{tpu_custom_call.1} parent=0 // pred_fallthru
    _
  // Predicated region
  $region34: #{tpu_custom_call.1} parent=0 // pred_check
    _
  $region35: #{tpu_custom_call.1} parent=0 // pred_check_branch
    %219 = sbr.rel (0) target = $region37
  $region36: #{tpu_custom_call.1} parent=0 // pred_region
    _
  $region37: #{tpu_custom_call.1} parent=0 // pred_fallthru
    _

</llo_original>
